<compile_context>
chip_gen: v7x
topology: tpu7x:2x2x1
jax: 0.10.0
libtpu: 0.0.40
codegen_flags: <defaults>
</compile_context>

<pallas_src>
import functools

import jax
import jax.numpy as jnp
from jax import lax
from jax.experimental import pallas as pl
from jax.experimental.pallas import tpu as pltpu


def _round_up(a, b):
    return (a + b - 1) // b * b


def _int_pow(x, n):
    """x**n for static integer n >= 1 via exponentiation-by-squaring (VPU muls)."""
    result = None
    base = x
    while n > 0:
        if n & 1:
            result = base if result is None else result * base
        n >>= 1
        if n:
            base = base * base
    return result


def _pow_static(x, p):
    """x**p for x > 0 and static float p, minimizing EUP transcendentals."""
    p_int = int(p)
    if float(p_int) == p and p_int >= 1:
        return _int_pow(x, p_int)                    # pure VPU muls, no EUP
    if p > 0 and float(int(p * 2)) == p * 2:         # half-integer p = k + 0.5
        k = int(p)
        r = jnp.sqrt(x)
        return r if k == 0 else _int_pow(x, k) * r   # 1 EUP op
    return jnp.exp(jnp.log(x) * p)                   # fallback: 2 EUP ops


def _gem_kernel(x_ref, o_ref, acc_ref, *, p, eps, L, L_rem):
    # x_ref  : (1, TC, TL) input block  (C on sublanes, L on lanes)
    # o_ref  : (1, TC, 1)  output block (resident across the L grid axis)
    # acc_ref: (TC, 1)     f32 running sum, resident across the L grid axis
    l_idx = pl.program_id(2)
    n_l = pl.num_programs(2)

    @pl.when(l_idx == 0)
    def _init():
        acc_ref[...] = jnp.zeros_like(acc_ref)

    x = x_ref[0].astype(jnp.float32)     # per-tile cast only: (TC, TL)
    x = jnp.maximum(x, eps)              # clamp(min=eps)
    xp = _pow_static(x, p)               # x**p

    if L_rem == 0:
        # Aligned L: no masking work anywhere in the hot loop.
        acc_ref[...] += jnp.sum(xp, axis=-1, keepdims=True)
    else:
        @pl.when(l_idx < n_l - 1)
        def _full_tile():
            acc_ref[...] += jnp.sum(xp, axis=-1, keepdims=True)

        @pl.when(l_idx == n_l - 1)
        def _tail_tile():
            # Only the final (partial) L tile pays the iota/cmp/select cost.
            col = lax.broadcasted_iota(jnp.int32, xp.shape, 1)
            tail = jnp.where(col < L_rem, xp, 0.0)
            acc_ref[...] += jnp.sum(tail, axis=-1, keepdims=True)

    @pl.when(l_idx == n_l - 1)
    def _finalize():
        m = acc_ref[...] * (1.0 / L)     # mean folded into one scale
        if p == 1.0:
            y = m
        elif p == 2.0:
            y = jnp.sqrt(m)
        elif p == 4.0:
            y = jnp.sqrt(jnp.sqrt(m))
        else:
            y = jnp.exp(jnp.log(m) * (1.0 / p))   # tiny epilogue: N*C elems
        o_ref[...] = y.reshape(o_ref.shape).astype(o_ref.dtype)


def generalized_mean_pooling(x, norm=3.0, output_size=1, eps=1e-6):
    assert norm > 0
    assert output_size == 1, "only output_size=1 (GeM) is supported"
    p = float(norm)
    N, C, L = x.shape

    itemsize = jnp.dtype(x.dtype).itemsize
    sub_mult = {4: 8, 2: 16, 1: 32}.get(itemsize, 8)   # dtype-aware sublane tile

    # L on lanes (multiple of 128), C on sublanes (multiple of sub_mult).
    TL = min(_round_up(L, 128), 2048)
    TC = min(_round_up(C, sub_mult), 512)

    # Cap the input block at ~2 MiB (double-buffered ~4 MiB: safe on all gens).
    max_block_bytes = 2 * 1024 * 1024
    while TC * TL * itemsize > max_block_bytes and TL > 128:
        TL = _round_up(TL // 2, 128)
    while TC * TL * itemsize > max_block_bytes and TC > sub_mult:
        TC = _round_up(TC // 2, sub_mult)

    # Megacore (v7x): guarantee >=2 tiles on the "parallel" axes when possible.
    if N * pl.cdiv(C, TC) < 2 and TC > sub_mult:
        TC = _round_up(TC // 2, sub_mult)

    grid = (N, pl.cdiv(C, TC), pl.cdiv(L, TL))

    kernel = functools.partial(
        _gem_kernel, p=p, eps=float(eps), L=L, L_rem=L % TL
    )

    return pl.pallas_call(
        kernel,
        out_shape=jax.ShapeDtypeStruct((N, C, 1), x.dtype),
        grid_spec=pltpu.PrefetchScalarGridSpec(
            num_scalar_prefetch=0,
            grid=grid,
            in_specs=[pl.BlockSpec((1, TC, TL), lambda n, c, l: (n, c, l))],
            out_specs=pl.BlockSpec((1, TC, 1), lambda n, c, l: (n, c, 0)),
            scratch_shapes=[pltpu.VMEM((TC, 1), jnp.float32)],
        ),
        compiler_params=pltpu.CompilerParams(
            dimension_semantics=("parallel", "parallel", "arbitrary"),
        ),
    )(x)


def _reference(x, norm=3.0, eps=1e-6):
    p = float(norm)
    xc = jnp.power(jnp.maximum(x.astype(jnp.float32), eps), p)
    m = jnp.mean(xc, axis=-1, keepdims=True)
    return jnp.power(m, 1.0 / p).astype(x.dtype)


if __name__ == "__main__":
    key = jax.random.PRNGKey(0)
    k1, k2 = jax.random.split(key)

    # Case 1: small canonical NCL input, integer norm (p=3) VPU fast path.
    x1 = jax.random.normal(k1, (2, 4, 16), dtype=jnp.float32)
    out1 = jax.block_until_ready(generalized_mean_pooling(x1, norm=3.0, eps=1e-6))
    ref1 = _reference(x1, norm=3.0, eps=1e-6)
    assert out1.shape == (2, 4, 1), out1.shape
    assert jnp.allclose(out1, ref1, atol=1e-4, rtol=1e-4), (out1, ref1)

    # Case 2: non-(8,128)-aligned C and L + half-integer norm (p=2.5)
    # (exercises partial blocks, the tail mask, and the sqrt fast path).
    x2 = jax.random.normal(k2, (2, 130, 49), dtype=jnp.float32)
    out2 = jax.block_until_ready(generalized_mean_pooling(x2, norm=2.5, eps=1e-6))
    ref2 = _reference(x2, norm=2.5, eps=1e-6)
    assert out2.shape == (2, 130, 1), out2.shape
    assert jnp.allclose(out2, ref2, atol=1e-4, rtol=1e-4), (out2, ref2)

    print("KERNEL_OK")
</pallas_src>

<mosaic_0001>
module attributes {stable_mosaic.version = 11 : i64} {
  func.func @_gem_kernel(%arg0: i32, %arg1: i32, %arg2: i32, %arg3: memref<1x8x128xf32, #tpu.memory_space<vmem>>, %arg4: memref<1x8x1xf32, #tpu.memory_space<vmem>>, %arg5: memref<8x1xf32, #tpu.memory_space<vmem>>) attributes {dimension_semantics = [#tpu.dimension_semantics<parallel>, #tpu.dimension_semantics<parallel>, #tpu.dimension_semantics<arbitrary>], iteration_bounds = array<i64: 2, 1, 1>, scalar_prefetch = 0 : i64, scratch_operands = 1 : i64, tpu.core_type = #tpu.core_type<tc>, window_params = [{transform_indices = @transform_0, window_bounds = array<i64: 1, 8, 128>}, {transform_indices = @transform_1, window_bounds = array<i64: 1, 8, 1>}]} {
    %c0_i32 = arith.constant 0 : i32
    %0 = arith.cmpi eq, %arg2, %c0_i32 : i32
    %1 = arith.extui %0 : i1 to i32
    %c0_i32_0 = arith.constant 0 : i32
    %2 = arith.cmpi ne, %1, %c0_i32_0 : i32
    scf.if %2 {
      %cst_9 = arith.constant 0.000000e+00 : f32
      %18 = vector.broadcast %cst_9 : f32 to vector<8x1xf32>
      %c0_10 = arith.constant 0 : index
      %c0_11 = arith.constant 0 : index
      %19 = vector.load %arg5[%c0_10, %c0_11] : memref<8x1xf32, #tpu.memory_space<vmem>>, vector<8x1xf32>
      tpu.vector_store %arg5[%c0_10, %c0_11], %18 {strides = array<i32>} : memref<8x1xf32, #tpu.memory_space<vmem>>, vector<8x1xf32>,
    } else {
    }
    %c0 = arith.constant 0 : index
    %c0_1 = arith.constant 0 : index
    %c0_2 = arith.constant 0 : index
    %3 = vector.load %arg3[%c0, %c0_1, %c0_2] : memref<1x8x128xf32, #tpu.memory_space<vmem>>, vector<1x8x128xf32>
    %4 = vector.shape_cast %3 : vector<1x8x128xf32> to vector<8x128xf32>
    %cst = arith.constant 9.99999997E-7 : f32
    %5 = vector.broadcast %cst : f32 to vector<8x128xf32>
    %6 = arith.maximumf %4, %5 : vector<8x128xf32>
    %7 = arith.mulf %6, %6 : vector<8x128xf32>
    %8 = arith.mulf %6, %7 : vector<8x128xf32>
    %c0_i32_3 = arith.constant 0 : i32
    %9 = arith.cmpi slt, %arg2, %c0_i32_3 : i32
    %10 = arith.extui %9 : i1 to i32
    %c0_i32_4 = arith.constant 0 : i32
    %11 = arith.cmpi ne, %10, %c0_i32_4 : i32
    scf.if %11 {
      %c0_9 = arith.constant 0 : index
      %c0_10 = arith.constant 0 : index
      %18 = vector.load %arg5[%c0_9, %c0_10] : memref<8x1xf32, #tpu.memory_space<vmem>>, vector<8x1xf32>
      %cst_11 = arith.constant dense<0.000000e+00> : vector<8xf32>
      %19 = vector.multi_reduction <add>, %8, %cst_11 [1] : vector<8x128xf32> to vector<8xf32>
      %20 = vector.shape_cast %19 : vector<8xf32> to vector<8x1xf32>
      %21 = arith.addf %18, %20 : vector<8x1xf32>
      %c0_12 = arith.constant 0 : index
      %c0_13 = arith.constant 0 : index
      %22 = vector.load %arg5[%c0_12, %c0_13] : memref<8x1xf32, #tpu.memory_space<vmem>>, vector<8x1xf32>
      tpu.vector_store %arg5[%c0_12, %c0_13], %21 {strides = array<i32>} : memref<8x1xf32, #tpu.memory_space<vmem>>, vector<8x1xf32>,
    } else {
    }
    %c0_i32_5 = arith.constant 0 : i32
    %12 = arith.cmpi eq, %arg2, %c0_i32_5 : i32
    %13 = arith.extui %12 : i1 to i32
    %c0_i32_6 = arith.constant 0 : i32
    %14 = arith.cmpi ne, %13, %c0_i32_6 : i32
    scf.if %14 {
      %18 = tpu.iota {dimensions = array<i32: 1>} : vector<8x128xi32>
      %c16_i32 = arith.constant 16 : i32
      %19 = vector.broadcast %c16_i32 : i32 to vector<8x128xi32>
      %20 = arith.cmpi slt, %18, %19 : vector<8x128xi32>
      %cst_9 = arith.constant 0.000000e+00 : f32
      %21 = vector.broadcast %cst_9 : f32 to vector<8x128xf32>
      %22 = arith.select %20, %8, %21 : vector<8x128xi1>, vector<8x128xf32>
      %c0_10 = arith.constant 0 : index
      %c0_11 = arith.constant 0 : index
      %23 = vector.load %arg5[%c0_10, %c0_11] : memref<8x1xf32, #tpu.memory_space<vmem>>, vector<8x1xf32>
      %cst_12 = arith.constant dense<0.000000e+00> : vector<8xf32>
      %24 = vector.multi_reduction <add>, %22, %cst_12 [1] : vector<8x128xf32> to vector<8xf32>
      %25 = vector.shape_cast %24 : vector<8xf32> to vector<8x1xf32>
      %26 = arith.addf %23, %25 : vector<8x1xf32>
      %c0_13 = arith.constant 0 : index
      %c0_14 = arith.constant 0 : index
      %27 = vector.load %arg5[%c0_13, %c0_14] : memref<8x1xf32, #tpu.memory_space<vmem>>, vector<8x1xf32>
      tpu.vector_store %arg5[%c0_13, %c0_14], %26 {strides = array<i32>} : memref<8x1xf32, #tpu.memory_space<vmem>>, vector<8x1xf32>,
    } else {
    }
    %c0_i32_7 = arith.constant 0 : i32
    %15 = arith.cmpi eq, %arg2, %c0_i32_7 : i32
    %16 = arith.extui %15 : i1 to i32
    %c0_i32_8 = arith.constant 0 : i32
    %17 = arith.cmpi ne, %16, %c0_i32_8 : i32
    scf.if %17 {
      %c0_9 = arith.constant 0 : index
      %c0_10 = arith.constant 0 : index
      %18 = vector.load %arg5[%c0_9, %c0_10] : memref<8x1xf32, #tpu.memory_space<vmem>>, vector<8x1xf32>
      %cst_11 = arith.constant 6.250000e-02 : f32
      %19 = vector.broadcast %cst_11 : f32 to vector<8x1xf32>
      %20 = arith.mulf %18, %19 : vector<8x1xf32>
      %21 = math.log %20 : vector<8x1xf32>
      %cst_12 = arith.constant 0.333333343 : f32
      %22 = vector.broadcast %cst_12 : f32 to vector<8x1xf32>
      %23 = arith.mulf %21, %22 : vector<8x1xf32>
      %24 = math.exp %23 : vector<8x1xf32>
      %25 = vector.shape_cast %24 : vector<8x1xf32> to vector<1x8x1xf32>
      %c0_13 = arith.constant 0 : index
      %c0_14 = arith.constant 0 : index
      %c0_15 = arith.constant 0 : index
      %26 = vector.load %arg4[%c0_13, %c0_14, %c0_15] : memref<1x8x1xf32, #tpu.memory_space<vmem>>, vector<1x8x1xf32>
      tpu.vector_store %arg4[%c0_13, %c0_14, %c0_15], %25 {strides = array<i32>} : memref<1x8x1xf32, #tpu.memory_space<vmem>>, vector<1x8x1xf32>,
    } else {
    }
    return
  }
  func.func @transform_0(%arg0: i32, %arg1: i32, %arg2: i32) -> (i32, i32, i32) {
    %c0_i32 = arith.constant 0 : i32
    return %arg0, %arg1, %arg2 : i32, i32, i32
  }
  func.func @transform_1(%arg0: i32, %arg1: i32, %arg2: i32) -> (i32, i32, i32) {
    %c0_i32 = arith.constant 0 : i32
    %c0_i32_0 = arith.constant 0 : i32
    return %arg0, %arg1, %c0_i32 : i32, i32, i32
  }
}

</mosaic_0001>

<llo_original>
// kernel: tpu_custom_call.1
$region0: #{tpu_custom_call.1}
  #allocation0 [shape = 'u32[]', space=smem, size = 0x4, offset = 0x4, fixed_abs, tag = 'smem constant byte address 0x4 - core index']
  #allocation1 [shape = 'u32[144,128]{1,0:T(1,128)}', space=vmem, size = 0x12000, scoped, tag = 'internal scratch']
  #allocation2 [shape = 'f32[8,1]{1,0:T(8,128)}', space=vmem, size = 0x1000, scoped, tag = 'scratch operand']
  %s0 = inlined_call_operand.hbm [shape: f32[2,4,16], index: 0, kind: input, shape index: {}]
  %s1 = inlined_call_operand.vmem [shape: f32[2,4,1], index: 1, kind: output, shape index: {}]
  %s2 = sld [smem:[#allocation0]]
  $region83: #{tpu_custom_call.1} parent=0
    _
  %s4 = ssub.s32 1, %s2
  %s5 = scalar_select 0, %s4, %s2
  $region1: #{tpu_custom_call.1} parent=0
    #allocation3 [shape = 'u8[8192]{0}', space=vmem, size = 0x2000, scoped, tag = 'input window, operand 0']
    #allocation4 [shape = 's32[2]{0}', space=sflag, size = 0x8, scoped, tag = 'scoped memory for tpu_custom_call.1']
    #allocation5 [shape = 'u8[8192]{0}', space=vmem, size = 0x2000, scoped, tag = 'output window, operand 0']
    %6 = vsyncpa [#allocation4], 0
    %s7 = scalar_lea.sflag [#allocation4], 1
    %8 = vsyncpa %s7, 0
    loop: start=0, step=1, limit=4
    $region2: #{tpu_custom_call.1} parent=1 // loop_pre_header
      _
    $region3: #{tpu_custom_call.1} parent=1 // loop_header
      %s10 = sphi 0, %s14
      %p11 = scmp.ge.s32.totalorder %s10, 4
      %s17 = sphi 0, %s36
      %s18 = sphi 0, %s32
      %s19 = sphi 0, %s28
      %s20 = sphi 0, %s17
      %s21 = sphi 0, %s18
      %s22 = sphi 0, %s19
      %s23 = sphi 0, %s20
      %s24 = sphi 0, %s21
      %s25 = sphi 0, %s22
      %s43 = sphi 0, %s45
      %s46 = sphi 0, %s43
      %s47 = sphi 0, %s46
      %s63 = sphi 0, %s47
      %s71 = sphi 0, %s73
      %s74 = sphi 0, %s71
      %s75 = sphi 0, %s74
      %s91 = sphi 0, %s75
    $region4: #{tpu_custom_call.1} parent=1 // loop_header_branch
      %13 = sbr.rel (%p11) target = $region8
    $region5: #{tpu_custom_call.1} parent=1 // loop_body
      %s15 = ssub.s32 %s10, 1
      %s16 = ssub.s32 %s10, 2
      %s26 = sadd.s32 1, %s19
      %p27 = scmp.ge.s32.totalorder %s26, 1
      %s28 = scalar_select %p27, 0, %s26
      %s29 = sadd.s32 1, %s18
      %s30 = scalar_select %p27, %s29, %s18
      %p31 = scmp.ge.s32.totalorder %s30, 1
      %s32 = scalar_select %p31, 0, %s30
      %s33 = sadd.s32 1, %s17
      %s34 = scalar_select %p31, %s33, %s17
      %p35 = scmp.ge.s32.totalorder %s34, 2
      %s36 = scalar_select %p35, 0, %s34
      %s37 = ssub.s32 %s17, %s36
      %s38 = ssub.s32 %s18, %s32
      %s39 = sor.u32 %s37, %s38
      %s40 = ssub.s32 %s19, %s28
      %s41 = sor.u32 %s39, %s40
      %p42 = scmp.eq.s32.totalorder %s41, 0
      %s44 = sadd.s32 %s43, 1
      %s45 = scalar_select %p42, %s43, %s44
      %p48 = pneg %p42
      %p49 = scmp.eq.s32.totalorder %s10, 1
      %p50 = por %p48, %p49
      %p51 = scmp.ne.s32.totalorder %s43, %s46
      %p52 = scmp.eq.s32.totalorder %s10, 0
      %p53 = por %p51, %p52
      %p54 = scmp.ne.s32.totalorder %s43, %s46
      %p55 = scmp.eq.s32.totalorder %s15, 1
      %p56 = por %p54, %p55
      %p57 = scmp.ne.s32.totalorder %s46, %s47
      %p58 = scmp.eq.s32.totalorder %s15, 0
      %p59 = por %p57, %p58
      %p60 = scmp.ne.s32.totalorder %s46, %s47
      %p61 = scmp.eq.s32.totalorder %s16, 1
      %p62 = por %p60, %p61
      %p64 = scmp.ne.s32.totalorder %s47, %s63
      %p65 = scmp.eq.s32.totalorder %s16, 0
      %p66 = por %p64, %p65
      %s67 = ssub.s32 %s17, %s36
      %s68 = ssub.s32 %s18, %s32
      %s69 = sor.u32 %s67, %s68
      %p70 = scmp.eq.s32.totalorder %s69, 0
      %s72 = sadd.s32 %s71, 1
      %s73 = scalar_select %p70, %s71, %s72
      %p76 = pneg %p70
      %p77 = scmp.eq.s32.totalorder %s10, 1
      %p78 = por %p76, %p77
      %p79 = scmp.ne.s32.totalorder %s71, %s74
      %p80 = scmp.eq.s32.totalorder %s10, 0
      %p81 = por %p79, %p80
      %p82 = scmp.ne.s32.totalorder %s71, %s74
      %p83 = scmp.eq.s32.totalorder %s15, 1
      %p84 = por %p82, %p83
      %p85 = scmp.ne.s32.totalorder %s74, %s75
      %p86 = scmp.eq.s32.totalorder %s15, 0
      %p87 = por %p85, %p86
      %p88 = scmp.ne.s32.totalorder %s74, %s75
      %p89 = scmp.eq.s32.totalorder %s16, 1
      %p90 = por %p88, %p89
      %p92 = scmp.ne.s32.totalorder %s75, %s91
      %p93 = scmp.eq.s32.totalorder %s16, 0
      %p94 = por %p92, %p93
      %p95 = scmp.le.s32.totalorder 1, %s10
      %p96 = scmp.lt.s32.totalorder %s10, 3
      %p97 = pnand %p95, %p96
      %p98 = pneg %p97
      // Predicated region
      $region9: #{tpu_custom_call.1} parent=5 // pred_check
        _
      $region10: #{tpu_custom_call.1} parent=5 // pred_check_branch
        %100 = sbr.rel (%p97) target = $region12
      $region11: #{tpu_custom_call.1} parent=5 // pred_region
        %s101 = ssub.s32 %s10, 1
      $region12: #{tpu_custom_call.1} parent=5 // pred_fallthru
        _
      %p102 = scmp.lt.s32.totalorder %s10, 2
      // Predicated region
      $region13: #{tpu_custom_call.1} parent=5 // pred_check
        %p103 = pneg %p102
      $region14: #{tpu_custom_call.1} parent=5 // pred_check_branch
        %105 = sbr.rel (%p103) target = $region16
      $region15: #{tpu_custom_call.1} parent=5 // pred_region
        // Predicated region
        $region17: #{tpu_custom_call.1} parent=15 // pred_check
          %p106 = pneg %p53
        $region18: #{tpu_custom_call.1} parent=15 // pred_check_branch
          %108 = sbr.rel (%p106) target = $region20
        $region19: #{tpu_custom_call.1} parent=15 // pred_region
          %s109 = sand.u32 %s43, 1
          %s110 = scalar_lea.sflag [#allocation4], %s109
          %s111 = sand.u32 %s43, 1
          %s112 = smul.addr %s111, 8
          %s113 = scalar_lea.vmem [#allocation3], %s112
          %s114 = smul.u32 2, %s18
          %s115 = ssub.s32 1, %s114
          %s116 = smul.u32 64, %s115
          %s118 = ssub.s32 128, %s116
          %119 = vsyncadd %s110, %s118
          %p120 = scmp.ne.s32.totalorder 0, %s116
          %s121 = sadd.s32 %s19, %s114
          %s122 = sadd.s32 %s121, %s17
          %s123 = smul.addr %s122, 64
          %s124 = scalar_lea.hbm %s0, %s123
          %s125 = smul.u32 4, %s115
          %s126 = sshll.u32 %s113, 4
          %s127 = int_to_ptr.vmem [resolvable:$true] %s126
          %s128 = sshll.u32 %s125, 4
          %132 = dma.hbm_to_vmem [thread:$0]  (%p120), %s124, %s128, %s127, %s110, 64, 64, 4
        $region20: #{tpu_custom_call.1} parent=15 // pred_fallthru
          _
      $region16: #{tpu_custom_call.1} parent=5 // pred_fallthru
        _
      %p133 = scmp.le.s32.totalorder 1, %s10
      %p134 = scmp.lt.s32.totalorder %s10, 3
      %p135 = pnand %p133, %p134
      %p136 = pneg %p135
      // Predicated region
      $region21: #{tpu_custom_call.1} parent=5 // pred_check
        _
      $region22: #{tpu_custom_call.1} parent=5 // pred_check_branch
        %138 = sbr.rel (%p135) target = $region24
      $region23: #{tpu_custom_call.1} parent=5 // pred_region
        %s139 = ssub.s32 %s10, 1
        %s140 = sand.u32 %s46, 1
        %s141 = scalar_lea.sflag [#allocation4], %s140
        %s142 = sand.u32 %s46, 1
        %s143 = smul.addr %s142, 8
        %s144 = scalar_lea.vmem [#allocation3], %s143
        // Predicated region
        $region25: #{tpu_custom_call.1} parent=23 // pred_check
          %p145 = pneg %p59
        $region26: #{tpu_custom_call.1} parent=23 // pred_check_branch
          %147 = sbr.rel (%p145) target = $region28
        $region27: #{tpu_custom_call.1} parent=23 // pred_region
          %148 = dma.done %s141, 128
        $region28: #{tpu_custom_call.1} parent=23 // pred_fallthru
          _
        %s149 = sand.u32 %s46, 1
        %s150 = scalar_lea.sflag [#allocation4], %s149
        %s151 = sand.u32 %s46, 1
        %s152 = smul.addr %s151, 8
        %s153 = scalar_lea.vmem [#allocation3], %s152
        %p154 = pneg %p59
        %p155 = pneg %p56
        %p156 = pneg %p87
        %p157 = pneg %p84
        %s158 = sand.u32 %s74, 1
        %s159 = sand.u32 %s74, 1
        %s160 = smul.addr %s159, 8
        %s161 = scalar_lea.vmem [#allocation5], %s160
        %s162 = smul.u32 2, %s21
        %s163 = ssub.s32 1, %s162
        %s164 = smul.u32 64, %s163
        %s165 = smul.u32 2, %s21
        %s166 = ssub.s32 1, %s165
        %s167 = smul.u32 64, %s166
        %p168 = scmp.eq.s32.totalorder %s22, 0
        // Predicated region
        $region29: #{tpu_custom_call.1} parent=23 // pred_check
          %p169 = pneg %p168
        $region30: #{tpu_custom_call.1} parent=23 // pred_check_branch
          %171 = sbr.rel (%p169) target = $region32
        $region31: #{tpu_custom_call.1} parent=23 // pred_region
          %vm172 = vcmask 7168
          %173 = vst.msk [vmem:[#allocation2] sm:$0xff] %vm172, 0.0
        $region32: #{tpu_custom_call.1} parent=23 // pred_fallthru
          _
        %v174 = vld [vmem:[%s144] sm:$0xff]
        %v175 = vmax.f32 %v174, 1e-06
        %v176 = vmul.f32 %v175, %v175
        %v177 = vmul.f32 %v175, %v176
        %p178 = scmp.lt.s32.totalorder %s22, 0
        // Predicated region
        $region33: #{tpu_custom_call.1} parent=23 // pred_check
          %p179 = pneg %p178
        $region34: #{tpu_custom_call.1} parent=23 // pred_check_branch
          %181 = sbr.rel (%p179) target = $region36
        $region35: #{tpu_custom_call.1} parent=23 // pred_region
          %v182 = vld [vmem:[#allocation2] sm:$0xff]
          %183 = vadd.xlane.f32.xlu0 %v177
          %v184 = vpop.xlane.xlu0 %183
          %v185 = vadd.f32 %v182, %v184
          %vm186 = vcmask 7168
          %187 = vst.msk [vmem:[#allocation2] sm:$0xff] %vm186, %v185
        $region36: #{tpu_custom_call.1} parent=23 // pred_fallthru
          _
        // Predicated region
        $region37: #{tpu_custom_call.1} parent=23 // pred_check
          %p188 = pneg %p168
        $region38: #{tpu_custom_call.1} parent=23 // pred_check_branch
          %190 = sbr.rel (%p188) target = $region40
        $region39: #{tpu_custom_call.1} parent=23 // pred_region
          %v191 = vlaneseq
          %v192 = vand.u32 %v191, 127
          %vm193 = vcmp.lt.s32.totalorder %v192, 16
          %v194 = vsel %vm193, %v177, 0.0
          %v195 = vld [vmem:[#allocation2] sm:$0xff]
          %196 = vadd.xlane.f32.xlu0 %v194
          %v197 = vpop.xlane.xlu0 %196
          %v198 = vadd.f32 %v195, %v197
          %vm199 = vcmask 7168
          %200 = vst.msk [vmem:[#allocation2] sm:$0xff] %vm199, %v198
          %v201 = vld [vmem:[#allocation2] sm:$0xff]
          %v202 = vmul.f32 %v201, 0.0625
          %v203 = vlog2.pop %v202
          %v204 = vmul.f32 %v203, 0.6931472
          %v205 = vmul.f32 %v204, 0.33333334
          %v206 = vmul.f32 %v205, 1.442695
          %v207 = vpow.pop %v206
          %208 = vst.msk [vmem:[%s161] sm:$0xff] %vm199, %v207
        $region40: #{tpu_custom_call.1} parent=23 // pred_fallthru
          _
        %s209 = sand.u32 %s74, 1
        %s210 = sand.u32 %s74, 1
        %s211 = smul.addr %s210, 8
        %s212 = scalar_lea.vmem [#allocation5], %s211
        // Predicated region
        $region41: #{tpu_custom_call.1} parent=23 // pred_check
          %p213 = pneg %p84
        $region42: #{tpu_custom_call.1} parent=23 // pred_check_branch
          %215 = sbr.rel (%p213) target = $region44
        $region43: #{tpu_custom_call.1} parent=23 // pred_region
          %s216 = smul.u32 2, %s21
          %s217 = ssub.s32 1, %s216
          %s218 = smul.u32 64, %s217
          %p219 = scmp.ne.s32.totalorder 0, %s218
          %s220 = sadd.s32 %s216, %s20
          %s221 = smul.addr %s220, 4
          %s222 = scalar_lea.vmem %s1, %s221
          // Predicated region
          $region45: #{tpu_custom_call.1} parent=43 // pred_check
            %p223 = pneg %p219
          $region46: #{tpu_custom_call.1} parent=43 // pred_check_branch
            %225 = sbr.rel (%p223) target = $region48
          $region47: #{tpu_custom_call.1} parent=43 // pred_region
            // Predicated region
            $region49: #{tpu_custom_call.1} parent=47 // pred_check
              _
            $region50: #{tpu_custom_call.1} parent=47 // pred_check_branch
              %227 = sbr.rel target = $region52
            $region51: #{tpu_custom_call.1} parent=47 // pred_region
              // Predicated region
              $region64: #{tpu_custom_call.1} parent=51 // pred_check
                _
              $region65: #{tpu_custom_call.1} parent=51 // pred_check_branch
                %250 = sbr.rel (0) target = $region67
              $region66: #{tpu_custom_call.1} parent=51 // pred_region
                // While loop
                $region68: #{tpu_custom_call.1} parent=66 // loop_pre_header
                  _
                $region69: #{tpu_custom_call.1} parent=66 // loop_header
                  %s253 = sphi 0, %s255
                  %p254 = scmp.ge.s32.totalorder %s253, %s217
                  %s258 = sphi 0, %s265
                  %s259 = sphi %s212, %s268
                  %s260 = sphi %s222, %s269
                $region70: #{tpu_custom_call.1} parent=66 // loop_header_branch
                  %257 = sbr.rel (%p254) target = $region74
                $region71: #{tpu_custom_call.1} parent=66 // loop_body
                  %v261 = vld [vmem:[%s259] sm:$0xf]
                  %262 = vst [vmem:[%s260] sm:$0xf] %v261
                  %s263 = sadd.s32 1, %s258
                  %p264 = scmp.ge.s32.totalorder %s263, %s217
                  %s265 = scalar_select %p264, 0, %s263
                  %s266 = smul.u32 %s265, 4
                  %s267 = smul.u32 %s265, 4
                  %s268 = scalar_lea.vmem %s212, %s266 [#allocation5]
                  %s269 = scalar_lea.vmem %s222, %s267
                $region72: #{tpu_custom_call.1} parent=66 // loop_footer
                  %s255 = sadd.s32 %s253, 1
                $region73: #{tpu_custom_call.1} parent=66 // loop_footer_branch
                  %252 = sbr.rel target = $region69
                $region74: #{tpu_custom_call.1} parent=66 // loop_exit
                  _
              $region67: #{tpu_custom_call.1} parent=51 // pred_fallthru
                _
            $region52: #{tpu_custom_call.1} parent=47 // pred_fallthru
              _
            // Predicated region
            $region53: #{tpu_custom_call.1} parent=47 // pred_check
              _
            $region54: #{tpu_custom_call.1} parent=47 // pred_check_branch
              %229 = sbr.rel (0) target = $region56
            $region55: #{tpu_custom_call.1} parent=47 // pred_region
              // While loop
              $region57: #{tpu_custom_call.1} parent=55 // loop_pre_header
                _
              $region58: #{tpu_custom_call.1} parent=55 // loop_header
                %s232 = sphi 0, %s234
                %p233 = scmp.ge.s32.totalorder %s232, %s217
                %s237 = sphi 0, %s244
                %s238 = sphi %s212, %s247
                %s239 = sphi %s222, %s248
              $region59: #{tpu_custom_call.1} parent=55 // loop_header_branch
                %236 = sbr.rel (%p233) target = $region63
              $region60: #{tpu_custom_call.1} parent=55 // loop_body
                %v240 = vld [vmem:[%s238] sm:$0xf]
                %241 = vst [vmem:[%s239] sm:$0xf] %v240
                %s242 = sadd.s32 1, %s237
                %p243 = scmp.ge.s32.totalorder %s242, %s217
                %s244 = scalar_select %p243, 0, %s242
                %s245 = smul.u32 %s244, 4
                %s246 = smul.u32 %s244, 4
                %s247 = scalar_lea.vmem %s212, %s245 [#allocation5]
                %s248 = scalar_lea.vmem %s222, %s246
              $region61: #{tpu_custom_call.1} parent=55 // loop_footer
                %s234 = sadd.s32 %s232, 1
              $region62: #{tpu_custom_call.1} parent=55 // loop_footer_branch
                %231 = sbr.rel target = $region58
              $region63: #{tpu_custom_call.1} parent=55 // loop_exit
                _
            $region56: #{tpu_custom_call.1} parent=47 // pred_fallthru
              _
          $region48: #{tpu_custom_call.1} parent=43 // pred_fallthru
            _
          %270 = vnop
        $region44: #{tpu_custom_call.1} parent=23 // pred_fallthru
          _
      $region24: #{tpu_custom_call.1} parent=5 // pred_fallthru
        _
      %p271 = scmp.le.s32.totalorder 2, %s10
      // Predicated region
      $region75: #{tpu_custom_call.1} parent=5 // pred_check
        %p272 = pneg %p271
      $region76: #{tpu_custom_call.1} parent=5 // pred_check_branch
        %274 = sbr.rel (%p272) target = $region78
      $region77: #{tpu_custom_call.1} parent=5 // pred_region
        %s275 = ssub.s32 %s10, 2
        // Predicated region
        $region79: #{tpu_custom_call.1} parent=77 // pred_check
          %p276 = pneg %p90
        $region80: #{tpu_custom_call.1} parent=77 // pred_check_branch
          %278 = sbr.rel (%p276) target = $region82
        $region81: #{tpu_custom_call.1} parent=77 // pred_region
          %s279 = sand.u32 %s75, 1
          %s280 = sand.u32 %s75, 1
          %s281 = smul.addr %s280, 8
          %s282 = scalar_lea.vmem [#allocation5], %s281
        $region82: #{tpu_custom_call.1} parent=77 // pred_fallthru
          _
      $region78: #{tpu_custom_call.1} parent=5 // pred_fallthru
        _
    $region6: #{tpu_custom_call.1} parent=1 // loop_footer
      %s14 = sadd.s32 1, %s10
    $region7: #{tpu_custom_call.1} parent=1 // loop_footer_branch
      %9 = sbr.rel target = $region3
    $region8: #{tpu_custom_call.1} parent=1 // loop_exit
      _
    %283 = vsyncpa [#allocation4], 1
    %s284 = scalar_lea.sflag [#allocation4], 1
    %285 = vsyncpa %s284, 1

</llo_original>
